<compile_context>
chip_gen: v7x
topology: tpu7x:2x2x1
jax: 0.10.0
libtpu: 0.0.40
codegen_flags: <defaults>
</compile_context>

<pallas_src>
import functools
import math

import jax
import jax.numpy as jnp
from jax.experimental import pallas as pl
from jax.experimental.pallas import tpu as pltpu


# ----------------------------------------------------------------------------
# Kernel
# ----------------------------------------------------------------------------
def _ffn_kernel(x_ref, w1_ref, w3_ref, w2_ref, o_ref, acc_ref, *, gate_dtype):
    # x_ref:   (tm, dim)       token tile, native dtype
    # w1_ref:  (dim, tn)       gate projection tile (canonical K,N layout)
    # w3_ref:  (dim, tn)       up   projection tile (canonical K,N layout)
    # w2_ref:  (tn, dim)       down projection tile (canonical K,N layout)
    # o_ref:   (tm, dim)
    # acc_ref: (tm, dim) f32   accumulator across intermediate (j) tiles
    j = pl.program_id(1)

    @pl.when(j == 0)
    def _():
        acc_ref[...] = jnp.zeros_like(acc_ref)

    x = x_ref[...]
    # Canonical (M,K)x(K,N) matmuls -> no in-kernel transposes of weights.
    h1 = jnp.dot(x, w1_ref[...], preferred_element_type=jnp.float32)   # (tm, tn)
    h3 = jnp.dot(x, w3_ref[...], preferred_element_type=jnp.float32)   # (tm, tn)

    # Gate in bf16 on bf16 models (v6e/v7x have bf16 VPU/EUP), f32 otherwise.
    h1 = h1.astype(gate_dtype)
    h3 = h3.astype(gate_dtype)
    gated = (h1 * jax.nn.sigmoid(h1)) * h3                             # (tm, tn)

    # Partial down-projection for this slice of the intermediate dimension.
    acc_ref[...] += jnp.dot(gated.astype(w2_ref.dtype), w2_ref[...],
                            preferred_element_type=jnp.float32)        # (tm, dim)

    @pl.when(j == pl.num_programs(1) - 1)
    def _():
        o_ref[...] = acc_ref[...].astype(o_ref.dtype)


# ----------------------------------------------------------------------------
# Tile / VMEM heuristics
# ----------------------------------------------------------------------------
def _round_up(x, m):
    return (x + m - 1) // m * m


def _vmem_capacity_bytes():
    try:
        return int(pltpu.get_tpu_info().vmem_capacity_bytes)
    except Exception:
        return 64 * 1024 * 1024   # conservative (v7x-sized) fallback


def _vmem_limit_bytes():
    # ~51 MiB on v7x (64 MiB physical), ~102 MiB on v5e/v6e (128 MiB physical).
    return int(_vmem_capacity_bytes() * 0.8)


_VMEM_HEADROOM = 6 * 1024 * 1024   # slack for Mosaic internal scratch


def _tile_vmem_bytes(tm, tn, dim, x_bytes, w_bytes, o_bytes):
    """Estimated double-buffered VMEM footprint of one grid step."""
    return (2 * tm * dim * x_bytes        # x tile
            + 2 * 2 * dim * tn * w_bytes  # w1 + w3 tiles
            + 2 * tn * dim * w_bytes      # w2 tile
            + 2 * tm * dim * o_bytes      # output tile
            + tm * dim * 4)               # f32 accumulator scratch


def _choose_tn(inter, dim, w_bytes, tm_target, tn_target, budget):
    """Intermediate-axis tile: budget-aware, prefers a 128-multiple divisor."""
    if inter <= 256:
        return inter                       # single tile, no padding
    tn = max(128, (tn_target // 128) * 128)
    while tn > 128 and _tile_vmem_bytes(tm_target, tn, dim,
                                        w_bytes, w_bytes, w_bytes) > budget:
        tn -= 128
    # Prefer an exact divisor >= 256 (no padded columns at all).
    for cand in range(tn, 255, -128):
        if inter % cand == 0:
            return cand
    return tn                              # caller zero-pads inter to mult. of tn


# ----------------------------------------------------------------------------
# Weight preparation (one-time, "weight-load time")
# ----------------------------------------------------------------------------
def prepare_weights(w1, w3, w2, *, dtype=None, tm_target=512, tn_target=512):
    """Transpose PyTorch-layout weights to canonical (K, N) layouts once.

    w1, w3: (inter, dim); w2: (dim, inter)  ->  w1_t/w3_t: (dim, inter_p),
    w2_t: (inter_p, dim), with inter zero-padded to a multiple of the chosen tn.
    Returns (w1_t, w3_t, w2_t, tn).
    """
    if dtype is not None:
        w1, w3, w2 = (w1.astype(dtype), w3.astype(dtype), w2.astype(dtype))
    inter, dim = w1.shape
    w_bytes = jnp.dtype(w1.dtype).itemsize

    budget = _vmem_limit_bytes() - _VMEM_HEADROOM
    tn = _choose_tn(inter, dim, w_bytes, tm_target, tn_target, budget)
    inter_p = _round_up(inter, tn)

    if inter_p == inter:
        w1_t, w3_t, w2_t = w1.T, w3.T, w2.T
    else:
        w1_t = jnp.zeros((dim, inter_p), w1.dtype).at[:, :inter].set(w1.T)
        w3_t = jnp.zeros((dim, inter_p), w3.dtype).at[:, :inter].set(w3.T)
        w2_t = jnp.zeros((inter_p, dim), w2.dtype).at[:inter, :].set(w2.T)
    return w1_t, w3_t, w2_t, tn


# ----------------------------------------------------------------------------
# Forward pass
# ----------------------------------------------------------------------------
@functools.partial(jax.jit, static_argnames=("tn", "tm_target"))
def feed_forward_prepared(x, w1_t, w3_t, w2_t, *, tn, tm_target=512):
    """x: (..., dim); w1_t/w3_t: (dim, inter_p); w2_t: (inter_p, dim)."""
    *lead, dim = x.shape
    M = math.prod(lead) if lead else 1
    xf = x.reshape(M, dim)
    inter_p = w1_t.shape[1]

    x_bytes = jnp.dtype(x.dtype).itemsize
    w_bytes = jnp.dtype(w1_t.dtype).itemsize

    vmem_limit = _vmem_limit_bytes()
    budget = vmem_limit - _VMEM_HEADROOM

    # Token tile: as large as budget allows (weights re-streamed less often).
    tm = _round_up(max(8, min(tm_target, _round_up(M, 8))), 8)
    while _tile_vmem_bytes(tm, tn, dim, x_bytes, w_bytes, x_bytes) > budget and tm > 8:
        tm = max(8, _round_up(tm // 2, 8))

    grid = (pl.cdiv(M, tm), inter_p // tn)   # partial last token tile is masked

    gate_dtype = jnp.bfloat16 if w1_t.dtype == jnp.bfloat16 else jnp.float32
    kernel = functools.partial(_ffn_kernel, gate_dtype=gate_dtype)

    out = pl.pallas_call(
        kernel,
        out_shape=jax.ShapeDtypeStruct((M, dim), x.dtype),
        grid_spec=pltpu.PrefetchScalarGridSpec(
            num_scalar_prefetch=0,
            grid=grid,
            in_specs=[
                pl.BlockSpec((tm, dim), lambda i, j: (i, 0)),   # x tile
                pl.BlockSpec((dim, tn), lambda i, j: (0, j)),   # w1 tile
                pl.BlockSpec((dim, tn), lambda i, j: (0, j)),   # w3 tile
                pl.BlockSpec((tn, dim), lambda i, j: (j, 0)),   # w2 tile
            ],
            out_specs=pl.BlockSpec((tm, dim), lambda i, j: (i, 0)),
            scratch_shapes=[pltpu.VMEM((tm, dim), jnp.float32)],
        ),
        compiler_params=pltpu.CompilerParams(
            dimension_semantics=("parallel", "arbitrary"),
            vmem_limit_bytes=vmem_limit,
        ),
    )(xf, w1_t, w3_t, w2_t)

    return out.reshape(*lead, dim) if lead else out.reshape(dim)


def feed_forward(x, w1, w3, w2, *, dtype=None, tm_target=512, tn_target=512):
    """Convenience wrapper (PyTorch-layout weights). In a real model call
    prepare_weights() once at load time and feed_forward_prepared() per step."""
    w1_t, w3_t, w2_t, tn = prepare_weights(
        w1, w3, w2, dtype=dtype, tm_target=tm_target, tn_target=tn_target)
    if dtype is not None:
        x = x.astype(dtype)
    return feed_forward_prepared(x, w1_t, w3_t, w2_t, tn=tn, tm_target=tm_target)


# ----------------------------------------------------------------------------
# Reference + test
# ----------------------------------------------------------------------------
def _reference(x, w1, w3, w2):
    h1 = jnp.einsum("bsd,id->bsi", x, w1)
    h3 = jnp.einsum("bsd,id->bsi", x, w3)
    g = (h1 * jax.nn.sigmoid(h1)) * h3
    return jnp.einsum("bsi,di->bsd", g, w2)


if __name__ == "__main__":
    # Small shapes consistent with FeedForward(config): dim=32, intermediate_size=64
    B, S, dim, inter = 2, 8, 32, 64

    key = jax.random.PRNGKey(0)
    kx, k1, k3, k2 = jax.random.split(key, 4)

    x = jax.random.normal(kx, (B, S, dim), dtype=jnp.float32)
    # Deterministic init mimicking nn.Linear default (uniform +/- 1/sqrt(fan_in))
    w1 = jax.random.uniform(k1, (inter, dim), jnp.float32,
                            -1.0 / dim ** 0.5, 1.0 / dim ** 0.5)
    w3 = jax.random.uniform(k3, (inter, dim), jnp.float32,
                            -1.0 / dim ** 0.5, 1.0 / dim ** 0.5)
    w2 = jax.random.uniform(k2, (dim, inter), jnp.float32,
                            -1.0 / inter ** 0.5, 1.0 / inter ** 0.5)

    ref = _reference(x, w1, w3, w2)

    # f32 path: matches the PyTorch module semantics exactly.
    out = jax.block_until_ready(feed_forward(x, w1, w3, w2))
    assert out.shape == (B, S, dim)
    assert jnp.allclose(out, ref, atol=1e-4, rtol=1e-4), "f32 mismatch vs reference"

    # bf16 path: production configuration (weights cast once at load time),
    # exercises the bf16-gating branch of the kernel.
    out_bf16 = jax.block_until_ready(feed_forward(x, w1, w3, w2, dtype=jnp.bfloat16))
    assert out_bf16.shape == (B, S, dim)
    assert float(jnp.max(jnp.abs(out_bf16.astype(jnp.float32) - ref))) < 0.1, \
        "bf16 path diverged"

    print("KERNEL_OK")
</pallas_src>

<mosaic_0001>
module attributes {stable_mosaic.version = 11 : i64} {
  func.func @_ffn_kernel(%arg0: i32, %arg1: i32, %arg2: memref<16x32xf32, #tpu.memory_space<vmem>>, %arg3: memref<32x64xf32, #tpu.memory_space<vmem>>, %arg4: memref<32x64xf32, #tpu.memory_space<vmem>>, %arg5: memref<64x32xf32, #tpu.memory_space<vmem>>, %arg6: memref<16x32xf32, #tpu.memory_space<vmem>>, %arg7: memref<16x32xf32, #tpu.memory_space<vmem>>) attributes {dimension_semantics = [#tpu.dimension_semantics<parallel>, #tpu.dimension_semantics<arbitrary>], iteration_bounds = array<i64: 1, 1>, scalar_prefetch = 0 : i64, scratch_operands = 1 : i64, tpu.core_type = #tpu.core_type<tc>, window_params = [{transform_indices = @transform_0, window_bounds = array<i64: 16, 32>}, {transform_indices = @transform_1, window_bounds = array<i64: 32, 64>}, {transform_indices = @transform_2, window_bounds = array<i64: 32, 64>}, {transform_indices = @transform_3, window_bounds = array<i64: 64, 32>}, {transform_indices = @transform_4, window_bounds = array<i64: 16, 32>}]} {
    %c0_i32 = arith.constant 0 : i32
    %0 = arith.cmpi eq, %arg1, %c0_i32 : i32
    %1 = arith.extui %0 : i1 to i32
    %c0_i32_0 = arith.constant 0 : i32
    %2 = arith.cmpi ne, %1, %c0_i32_0 : i32
    scf.if %2 {
      %cst_17 = arith.constant 0.000000e+00 : f32
      %23 = vector.broadcast %cst_17 : f32 to vector<16x32xf32>
      %c0_18 = arith.constant 0 : index
      %c0_19 = arith.constant 0 : index
      %24 = vector.load %arg7[%c0_18, %c0_19] : memref<16x32xf32, #tpu.memory_space<vmem>>, vector<16x32xf32>
      tpu.vector_store %arg7[%c0_18, %c0_19], %23 {strides = array<i32>} : memref<16x32xf32, #tpu.memory_space<vmem>>, vector<16x32xf32>,
    } else {
    }
    %c0 = arith.constant 0 : index
    %c0_1 = arith.constant 0 : index
    %3 = vector.load %arg2[%c0, %c0_1] : memref<16x32xf32, #tpu.memory_space<vmem>>, vector<16x32xf32>
    %c0_2 = arith.constant 0 : index
    %c0_3 = arith.constant 0 : index
    %4 = vector.load %arg3[%c0_2, %c0_3] : memref<32x64xf32, #tpu.memory_space<vmem>>, vector<32x64xf32>
    %cst = arith.constant dense<0.000000e+00> : vector<16x64xf32>
    %5 = tpu.matmul %3, %4, %cst {dimension_numbers = #tpu.dot_dimension_numbers<[1], [0], [0], [1], [0, 0, 1, 1], [], []>} : vector<16x32xf32>, vector<32x64xf32>, vector<16x64xf32> -> vector<16x64xf32>
    %c0_4 = arith.constant 0 : index
    %c0_5 = arith.constant 0 : index
    %6 = vector.load %arg4[%c0_4, %c0_5] : memref<32x64xf32, #tpu.memory_space<vmem>>, vector<32x64xf32>
    %cst_6 = arith.constant dense<0.000000e+00> : vector<16x64xf32>
    %7 = tpu.matmul %3, %6, %cst_6 {dimension_numbers = #tpu.dot_dimension_numbers<[1], [0], [0], [1], [0, 0, 1, 1], [], []>} : vector<16x32xf32>, vector<32x64xf32>, vector<16x64xf32> -> vector<16x64xf32>
    %8 = arith.negf %5 : vector<16x64xf32>
    %9 = math.exp %8 : vector<16x64xf32>
    %cst_7 = arith.constant 1.000000e+00 : f32
    %10 = vector.broadcast %cst_7 : f32 to vector<16x64xf32>
    %11 = arith.addf %10, %9 : vector<16x64xf32>
    %12 = arith.divf %10, %11 : vector<16x64xf32>
    %13 = arith.mulf %5, %12 : vector<16x64xf32>
    %14 = arith.mulf %13, %7 : vector<16x64xf32>
    %c0_8 = arith.constant 0 : index
    %c0_9 = arith.constant 0 : index
    %15 = vector.load %arg7[%c0_8, %c0_9] : memref<16x32xf32, #tpu.memory_space<vmem>>, vector<16x32xf32>
    %c0_10 = arith.constant 0 : index
    %c0_11 = arith.constant 0 : index
    %16 = vector.load %arg5[%c0_10, %c0_11] : memref<64x32xf32, #tpu.memory_space<vmem>>, vector<64x32xf32>
    %cst_12 = arith.constant dense<0.000000e+00> : vector<16x32xf32>
    %17 = tpu.matmul %14, %16, %cst_12 {dimension_numbers = #tpu.dot_dimension_numbers<[1], [0], [0], [1], [0, 0, 1, 1], [], []>} : vector<16x64xf32>, vector<64x32xf32>, vector<16x32xf32> -> vector<16x32xf32>
    %18 = arith.addf %15, %17 : vector<16x32xf32>
    %c0_13 = arith.constant 0 : index
    %c0_14 = arith.constant 0 : index
    %19 = vector.load %arg7[%c0_13, %c0_14] : memref<16x32xf32, #tpu.memory_space<vmem>>, vector<16x32xf32>
    tpu.vector_store %arg7[%c0_13, %c0_14], %18 {strides = array<i32>} : memref<16x32xf32, #tpu.memory_space<vmem>>, vector<16x32xf32>,
    %c0_i32_15 = arith.constant 0 : i32
    %20 = arith.cmpi eq, %arg1, %c0_i32_15 : i32
    %21 = arith.extui %20 : i1 to i32
    %c0_i32_16 = arith.constant 0 : i32
    %22 = arith.cmpi ne, %21, %c0_i32_16 : i32
    scf.if %22 {
      %c0_17 = arith.constant 0 : index
      %c0_18 = arith.constant 0 : index
      %23 = vector.load %arg7[%c0_17, %c0_18] : memref<16x32xf32, #tpu.memory_space<vmem>>, vector<16x32xf32>
      %c0_19 = arith.constant 0 : index
      %c0_20 = arith.constant 0 : index
      %24 = vector.load %arg6[%c0_19, %c0_20] : memref<16x32xf32, #tpu.memory_space<vmem>>, vector<16x32xf32>
      tpu.vector_store %arg6[%c0_19, %c0_20], %23 {strides = array<i32>} : memref<16x32xf32, #tpu.memory_space<vmem>>, vector<16x32xf32>,
    } else {
    }
    return
  }
  func.func @transform_0(%arg0: i32, %arg1: i32) -> (i32, i32) {
    %c0_i32 = arith.constant 0 : i32
    %c0_i32_0 = arith.constant 0 : i32
    return %arg0, %c0_i32 : i32, i32
  }
  func.func @transform_1(%arg0: i32, %arg1: i32) -> (i32, i32) {
    %c0_i32 = arith.constant 0 : i32
    %c0_i32_0 = arith.constant 0 : i32
    return %c0_i32, %arg1 : i32, i32
  }
  func.func @transform_2(%arg0: i32, %arg1: i32) -> (i32, i32) {
    %c0_i32 = arith.constant 0 : i32
    %c0_i32_0 = arith.constant 0 : i32
    return %c0_i32, %arg1 : i32, i32
  }
  func.func @transform_3(%arg0: i32, %arg1: i32) -> (i32, i32) {
    %c0_i32 = arith.constant 0 : i32
    %c0_i32_0 = arith.constant 0 : i32
    return %arg1, %c0_i32 : i32, i32
  }
  func.func @transform_4(%arg0: i32, %arg1: i32) -> (i32, i32) {
    %c0_i32 = arith.constant 0 : i32
    %c0_i32_0 = arith.constant 0 : i32
    return %arg0, %c0_i32 : i32, i32
  }
}

</mosaic_0001>

<llo_original>
// kernel: feed_forward_prepared.1
$region0: #{feed_forward_prepared.1}
  #allocation0 [shape = 'u32[]', space=smem, size = 0x4, offset = 0x4, fixed_abs, tag = 'smem constant byte address 0x4 - core index']
  #allocation1 [shape = 'u32[144,128]{1,0:T(1,128)}', space=vmem, size = 0x12000, scoped, tag = 'internal scratch']
  #allocation2 [shape = 'f32[16,32]{1,0:T(8,128)}', space=vmem, size = 0x2000, scoped, tag = 'scratch operand']
  %s0 = inlined_call_operand.vmem [shape: f32[16,32], index: 0, kind: input, shape index: {}]
  %s1 = inlined_call_operand.vmem [shape: f32[32,64], index: 1, kind: input, shape index: {}]
  %s2 = inlined_call_operand.vmem [shape: f32[32,64], index: 2, kind: input, shape index: {}]
  %s3 = inlined_call_operand.vmem [shape: f32[64,32], index: 3, kind: input, shape index: {}]
  %s4 = inlined_call_operand.hbm [shape: f32[16,32], index: 4, kind: output, shape index: {}]
  %s5 = sld [smem:[#allocation0]]
  $region34: #{feed_forward_prepared.1} parent=0
    _
  %s7 = ssub.s32 1, %s5
  %s8 = scalar_select 0, %s7, %s5
  $region1: #{feed_forward_prepared.1} parent=0
    #allocation3 [shape = 'u8[8192]{0}', space=vmem, size = 0x2000, scoped, tag = 'output window, operand 0, single buffered']
    #allocation4 [shape = 's32[1]{0}', space=sflag, size = 0x4, scoped, tag = 'scoped memory for feed_forward_prepared.1']
    %9 = vsyncpa [#allocation4], 0
    // Predicated region
    $region2: #{feed_forward_prepared.1} parent=1 // pred_check
      _
    $region3: #{feed_forward_prepared.1} parent=1 // pred_check_branch
      %11 = sbr.rel (0) target = $region5
    $region4: #{feed_forward_prepared.1} parent=1 // pred_region
      _
    $region5: #{feed_forward_prepared.1} parent=1 // pred_fallthru
      _
    // Predicated region
    $region6: #{feed_forward_prepared.1} parent=1 // pred_check
      _
    $region7: #{feed_forward_prepared.1} parent=1 // pred_check_branch
      %13 = sbr.rel (0) target = $region9
    $region8: #{feed_forward_prepared.1} parent=1 // pred_region
      _
    $region9: #{feed_forward_prepared.1} parent=1 // pred_fallthru
      _
    // Predicated region
    $region10: #{feed_forward_prepared.1} parent=1 // pred_check
      _
    $region11: #{feed_forward_prepared.1} parent=1 // pred_check_branch
      %15 = sbr.rel (0) target = $region13
    $region12: #{feed_forward_prepared.1} parent=1 // pred_region
      _
    $region13: #{feed_forward_prepared.1} parent=1 // pred_fallthru
      _
    // Predicated region
    $region14: #{feed_forward_prepared.1} parent=1 // pred_check
      _
    $region15: #{feed_forward_prepared.1} parent=1 // pred_check_branch
      %17 = sbr.rel (0) target = $region17
    $region16: #{feed_forward_prepared.1} parent=1 // pred_region
      _
    $region17: #{feed_forward_prepared.1} parent=1 // pred_fallthru
      _
    %p18 = scmp.eq.s32.totalorder 0, 0
    // Predicated region
    $region18: #{feed_forward_prepared.1} parent=1 // pred_check
      %p19 = pneg %p18
    $region19: #{feed_forward_prepared.1} parent=1 // pred_check_branch
      %21 = sbr.rel (%p19) target = $region21
    $region20: #{feed_forward_prepared.1} parent=1 // pred_region
      %vm22 = vcmask 261120
      %23 = vst.msk [vmem:[#allocation2] sm:$0xff] %vm22, 0.0
      %24 = vst.msk [vmem:[#allocation2 + $0x8] sm:$0xff] %vm22, 0.0
    $region21: #{feed_forward_prepared.1} parent=1 // pred_fallthru
      _
    %v25 = vld [vmem:[%s0] sm:$0xff]
    %v26 = vld [vmem:[%s0 + $0x8] sm:$0xff]
    %v27 = vld [vmem:[%s1] sm:$0xff]
    %v28 = vld [vmem:[%s1 + $0x8] sm:$0xff]
    %v29 = vld [vmem:[%s1 + $0x10] sm:$0xff]
    %v30 = vld [vmem:[%s1 + $0x18] sm:$0xff]
    %vm31 = vcmask 261120
    %v33 = vsel %vm31, %v25, 0
    %v36 = vsel %vm31, %v26, 0
    %38 = vmatprep.subr.mxu0 0.0
    %39 = vmatpush1.msra.mxu0 %v27
    %40 = vmatprep.subr.mxu0 0.0
    %41 = vmatpush1.msra.mxu0 %v28
    %42 = vmatprep.subr.mxu0 0.0
    %43 = vmatpush1.msra.mxu0 %v29
    %44 = vmatprep.subr.mxu0 0.0
    %45 = vmatpush1.msra.mxu0 %v30
    %46 = vmatprep.subr.mxu0 0.0
    %47 = vmatpush1.msra.mxu0 0.0
    %48 = vmatprep.subr.mxu0 0.0
    %49 = vmatpush1.msra.mxu0 0.0
    %50 = vmatprep.subr.mxu0 0.0
    %51 = vmatpush1.msra.mxu0 0.0
    %52 = vmatprep.subr.mxu0 0.0
    %53 = vmatpush1.msra.mxu0 0.0
    %54 = vmatprep.subr.mxu0 0.0
    %55 = vmatpush1.msra.mxu0 0.0
    %56 = vmatprep.subr.mxu0 0.0
    %57 = vmatpush1.msra.mxu0 0.0
    %58 = vmatprep.subr.mxu0 0.0
    %59 = vmatpush1.msra.mxu0 0.0
    %60 = vmatprep.subr.mxu0 0.0
    %61 = vmatpush1.msra.mxu0 0.0
    %62 = vmatprep.subr.mxu0 0.0
    %63 = vmatpush1.msra.mxu0 0.0
    %64 = vmatprep.subr.mxu0 0.0
    %65 = vmatpush1.msra.mxu0 0.0
    %66 = vmatprep.subr.mxu0 0.0
    %67 = vmatpush1.msra.mxu0 0.0
    %68 = vmatprep.subr.mxu0 0.0
    %69 = vmatpush1.msra.mxu0 0.0
    %70 = vmatprep.subr.mxu0 0.0
    %71 = vmatpush1.msra.mxu0 0.0
    %72 = vmatprep.subr.mxu0 0.0
    %73 = vmatpush1.msra.mxu0 0.0
    %74 = vmatprep.subr.mxu0 0.0
    %75 = vmatpush1.msra.mxu0 0.0
    %76 = vmatprep.subr.mxu0 0.0
    %77 = vmatpush1.msra.mxu0 0.0
    %78 = vmatprep.subr.mxu0 0.0
    %79 = vmatpush1.msra.mxu0 0.0
    %80 = vmatprep.subr.mxu0 0.0
    %81 = vmatpush1.msra.mxu0 0.0
    %82 = vmatprep.subr.mxu0 0.0
    %83 = vmatpush1.msra.mxu0 0.0
    %84 = vmatprep.subr.mxu0 0.0
    %85 = vmatpush1.msra.mxu0 0.0
    %86 = vmatprep.subr.mxu0 0.0
    %87 = vmatpush1.msra.mxu0 0.0
    %88 = vmatprep.subr.mxu0 0.0
    %89 = vmatpush1.msra.mxu0 0.0
    %90 = vmatprep.subr.mxu0 0.0
    %91 = vmatpush1.msra.mxu0 0.0
    %92 = vmatprep.subr.mxu0 0.0
    %93 = vmatpush1.msra.mxu0 0.0
    %94 = vmatprep.subr.mxu0 0.0
    %95 = vmatpush1.msra.mxu0 0.0
    %96 = vmatprep.subr.mxu0 0.0
    %97 = vmatpush1.msra.mxu0 0.0
    %98 = vmatprep.subr.mxu0 0.0
    %99 = vmatpush1.msra.mxu0 0.0
    %100 = vmatprep.subr.mxu0 0.0
    %101 = vmatpush1.msra.mxu0 0.0
    %102 = vmatprep.mubr.f32.mxu0 0.0
    %103 = vmatmul.mubr.f32.gmra.mrb[0].mxu0 %v33
    %v104 = vpop.f32.mrb[0].mxu0
    %v105 = vadd.f32 0.0, %v104
    %v106 = vpop.f32.mrb[0].mxu0
    %107 = vmatprep.mubr.f32.mxu0 0.0
    %108 = vmatmul.mubr.f32.gmra.mrb[0].mxu0 %v36
    %v109 = vpop.f32.mrb[0].mxu0
    %v110 = vadd.f32 0.0, %v109
    %v111 = vpop.f32.mrb[0].mxu0
    %112 = vdwg.mxu0
    %v113 = vld [vmem:[%s2] sm:$0xff]
    %v114 = vld [vmem:[%s2 + $0x8] sm:$0xff]
    %v115 = vld [vmem:[%s2 + $0x10] sm:$0xff]
    %v116 = vld [vmem:[%s2 + $0x18] sm:$0xff]
    %117 = vmatprep.subr.mxu0 0.0
    %118 = vmatpush1.msra.mxu0 %v113
    %119 = vmatprep.subr.mxu0 0.0
    %120 = vmatpush1.msra.mxu0 %v114
    %121 = vmatprep.subr.mxu0 0.0
    %122 = vmatpush1.msra.mxu0 %v115
    %123 = vmatprep.subr.mxu0 0.0
    %124 = vmatpush1.msra.mxu0 %v116
    %125 = vmatprep.subr.mxu0 0.0
    %126 = vmatpush1.msra.mxu0 0.0
    %127 = vmatprep.subr.mxu0 0.0
    %128 = vmatpush1.msra.mxu0 0.0
    %129 = vmatprep.subr.mxu0 0.0
    %130 = vmatpush1.msra.mxu0 0.0
    %131 = vmatprep.subr.mxu0 0.0
    %132 = vmatpush1.msra.mxu0 0.0
    %133 = vmatprep.subr.mxu0 0.0
    %134 = vmatpush1.msra.mxu0 0.0
    %135 = vmatprep.subr.mxu0 0.0
    %136 = vmatpush1.msra.mxu0 0.0
    %137 = vmatprep.subr.mxu0 0.0
    %138 = vmatpush1.msra.mxu0 0.0
    %139 = vmatprep.subr.mxu0 0.0
    %140 = vmatpush1.msra.mxu0 0.0
    %141 = vmatprep.subr.mxu0 0.0
    %142 = vmatpush1.msra.mxu0 0.0
    %143 = vmatprep.subr.mxu0 0.0
    %144 = vmatpush1.msra.mxu0 0.0
    %145 = vmatprep.subr.mxu0 0.0
    %146 = vmatpush1.msra.mxu0 0.0
    %147 = vmatprep.subr.mxu0 0.0
    %148 = vmatpush1.msra.mxu0 0.0
    %149 = vmatprep.subr.mxu0 0.0
    %150 = vmatpush1.msra.mxu0 0.0
    %151 = vmatprep.subr.mxu0 0.0
    %152 = vmatpush1.msra.mxu0 0.0
    %153 = vmatprep.subr.mxu0 0.0
    %154 = vmatpush1.msra.mxu0 0.0
    %155 = vmatprep.subr.mxu0 0.0
    %156 = vmatpush1.msra.mxu0 0.0
    %157 = vmatprep.subr.mxu0 0.0
    %158 = vmatpush1.msra.mxu0 0.0
    %159 = vmatprep.subr.mxu0 0.0
    %160 = vmatpush1.msra.mxu0 0.0
    %161 = vmatprep.subr.mxu0 0.0
    %162 = vmatpush1.msra.mxu0 0.0
    %163 = vmatprep.subr.mxu0 0.0
    %164 = vmatpush1.msra.mxu0 0.0
    %165 = vmatprep.subr.mxu0 0.0
    %166 = vmatpush1.msra.mxu0 0.0
    %167 = vmatprep.subr.mxu0 0.0
    %168 = vmatpush1.msra.mxu0 0.0
    %169 = vmatprep.subr.mxu0 0.0
    %170 = vmatpush1.msra.mxu0 0.0
    %171 = vmatprep.subr.mxu0 0.0
    %172 = vmatpush1.msra.mxu0 0.0
    %173 = vmatprep.subr.mxu0 0.0
    %174 = vmatpush1.msra.mxu0 0.0
    %175 = vmatprep.subr.mxu0 0.0
    %176 = vmatpush1.msra.mxu0 0.0
    %177 = vmatprep.subr.mxu0 0.0
    %178 = vmatpush1.msra.mxu0 0.0
    %179 = vmatprep.subr.mxu0 0.0
    %180 = vmatpush1.msra.mxu0 0.0
    %181 = vmatprep.mubr.f32.mxu0 0.0
    %182 = vmatmul.mubr.f32.gmra.mrb[0].mxu0 %v33
    %v183 = vpop.f32.mrb[0].mxu0
    %v184 = vadd.f32 0.0, %v183
    %v185 = vpop.f32.mrb[0].mxu0
    %186 = vmatprep.mubr.f32.mxu0 0.0
    %187 = vmatmul.mubr.f32.gmra.mrb[0].mxu0 %v36
    %v188 = vpop.f32.mrb[0].mxu0
    %v189 = vadd.f32 0.0, %v188
    %v190 = vpop.f32.mrb[0].mxu0
    %191 = vdwg.mxu0
    %v192 = vxor.u32 %v105, 2147483648
    %v193 = vxor.u32 %v110, 2147483648
    %v194 = vmul.f32 %v192, 1.442695
    %v195 = vpow.pop %v194
    %v196 = vmul.f32 %v193, 1.442695
    %v197 = vpow.pop %v196
    %v198 = vadd.f32 %v195, 1.0
    %v199 = vadd.f32 %v197, 1.0
    %v200 = vrcp.pop %v198
    %v201 = vmul.f32 1.0, %v200
    %v202 = vrcp.pop %v199
    %v203 = vmul.f32 1.0, %v202
    %v204 = vmul.f32 %v105, %v201
    %v205 = vmul.f32 %v110, %v203
    %v206 = vmul.f32 %v204, %v184
    %v207 = vmul.f32 %v205, %v189
    %v208 = vld [vmem:[#allocation2] sm:$0xff]
    %v209 = vld [vmem:[#allocation2 + $0x8] sm:$0xff]
    %v210 = vld [vmem:[%s3] sm:$0xff]
    %v211 = vld [vmem:[%s3 + $0x8] sm:$0xff]
    %v212 = vld [vmem:[%s3 + $0x10] sm:$0xff]
    %v213 = vld [vmem:[%s3 + $0x18] sm:$0xff]
    %v214 = vld [vmem:[%s3 + $0x20] sm:$0xff]
    %v215 = vld [vmem:[%s3 + $0x28] sm:$0xff]
    %v216 = vld [vmem:[%s3 + $0x30] sm:$0xff]
    %v217 = vld [vmem:[%s3 + $0x38] sm:$0xff]
    %vm218 = vcmask 523264
    %v220 = vsel %vm218, %v206, 0
    %v223 = vsel %vm218, %v207, 0
    %225 = vmatprep.subr.mxu0 0.0
    %226 = vmatpush1.msra.mxu0 %v210
    %227 = vmatprep.subr.mxu0 0.0
    %228 = vmatpush1.msra.mxu0 %v211
    %229 = vmatprep.subr.mxu0 0.0
    %230 = vmatpush1.msra.mxu0 %v212
    %231 = vmatprep.subr.mxu0 0.0
    %232 = vmatpush1.msra.mxu0 %v213
    %233 = vmatprep.subr.mxu0 0.0
    %234 = vmatpush1.msra.mxu0 %v214
    %235 = vmatprep.subr.mxu0 0.0
    %236 = vmatpush1.msra.mxu0 %v215
    %237 = vmatprep.subr.mxu0 0.0
    %238 = vmatpush1.msra.mxu0 %v216
    %239 = vmatprep.subr.mxu0 0.0
    %240 = vmatpush1.msra.mxu0 %v217
    %241 = vmatprep.subr.mxu0 0.0
    %242 = vmatpush1.msra.mxu0 0.0
    %243 = vmatprep.subr.mxu0 0.0
    %244 = vmatpush1.msra.mxu0 0.0
    %245 = vmatprep.subr.mxu0 0.0
    %246 = vmatpush1.msra.mxu0 0.0
    %247 = vmatprep.subr.mxu0 0.0
    %248 = vmatpush1.msra.mxu0 0.0
    %249 = vmatprep.subr.mxu0 0.0
    %250 = vmatpush1.msra.mxu0 0.0
    %251 = vmatprep.subr.mxu0 0.0
    %252 = vmatpush1.msra.mxu0 0.0
    %253 = vmatprep.subr.mxu0 0.0
    %254 = vmatpush1.msra.mxu0 0.0
    %255 = vmatprep.subr.mxu0 0.0
    %256 = vmatpush1.msra.mxu0 0.0
    %257 = vmatprep.subr.mxu0 0.0
    %258 = vmatpush1.msra.mxu0 0.0
    %259 = vmatprep.subr.mxu0 0.0
    %260 = vmatpush1.msra.mxu0 0.0
    %261 = vmatprep.subr.mxu0 0.0
    %262 = vmatpush1.msra.mxu0 0.0
    %263 = vmatprep.subr.mxu0 0.0
    %264 = vmatpush1.msra.mxu0 0.0
    %265 = vmatprep.subr.mxu0 0.0
    %266 = vmatpush1.msra.mxu0 0.0
    %267 = vmatprep.subr.mxu0 0.0
    %268 = vmatpush1.msra.mxu0 0.0
    %269 = vmatprep.subr.mxu0 0.0
    %270 = vmatpush1.msra.mxu0 0.0
    %271 = vmatprep.subr.mxu0 0.0
    %272 = vmatpush1.msra.mxu0 0.0
    %273 = vmatprep.subr.mxu0 0.0
    %274 = vmatpush1.msra.mxu0 0.0
    %275 = vmatprep.subr.mxu0 0.0
    %276 = vmatpush1.msra.mxu0 0.0
    %277 = vmatprep.subr.mxu0 0.0
    %278 = vmatpush1.msra.mxu0 0.0
    %279 = vmatprep.subr.mxu0 0.0
    %280 = vmatpush1.msra.mxu0 0.0
    %281 = vmatprep.subr.mxu0 0.0
    %282 = vmatpush1.msra.mxu0 0.0
    %283 = vmatprep.subr.mxu0 0.0
    %284 = vmatpush1.msra.mxu0 0.0
    %285 = vmatprep.subr.mxu0 0.0
    %286 = vmatpush1.msra.mxu0 0.0
    %287 = vmatprep.subr.mxu0 0.0
    %288 = vmatpush1.msra.mxu0 0.0
    %289 = vmatprep.mubr.f32.mxu0 0.0
    %290 = vmatmul.mubr.f32.gmra.mrb[0].mxu0 %v220
    %v291 = vpop.f32.mrb[0].mxu0
    %v292 = vadd.f32 0.0, %v291
    %v293 = vpop.f32.mrb[0].mxu0
    %294 = vmatprep.mubr.f32.mxu0 0.0
    %295 = vmatmul.mubr.f32.gmra.mrb[0].mxu0 %v223
    %v296 = vpop.f32.mrb[0].mxu0
    %v297 = vadd.f32 0.0, %v296
    %v298 = vpop.f32.mrb[0].mxu0
    %299 = vdwg.mxu0
    %v300 = vadd.f32 %v208, %v292
    %v301 = vadd.f32 %v209, %v297
    %302 = vst.msk [vmem:[#allocation2] sm:$0xff] %vm31, %v300
    %303 = vst.msk [vmem:[#allocation2 + $0x8] sm:$0xff] %vm31, %v301
    // Predicated region
    $region22: #{feed_forward_prepared.1} parent=1 // pred_check
      %p304 = pneg %p18
    $region23: #{feed_forward_prepared.1} parent=1 // pred_check_branch
      %306 = sbr.rel (%p304) target = $region25
    $region24: #{feed_forward_prepared.1} parent=1 // pred_region
      %v307 = vld [vmem:[#allocation2] sm:$0xff]
      %v308 = vld [vmem:[#allocation2 + $0x8] sm:$0xff]
      %309 = vst.msk [vmem:[#allocation3] sm:$0xff] %vm31, %v307
      %310 = vst.msk [vmem:[#allocation3 + $0x8] sm:$0xff] %vm31, %v308
    $region25: #{feed_forward_prepared.1} parent=1 // pred_fallthru
      _
    // Predicated region
    $region26: #{feed_forward_prepared.1} parent=1 // pred_check
      _
    $region27: #{feed_forward_prepared.1} parent=1 // pred_check_branch
      %312 = sbr.rel (0) target = $region29
    $region28: #{feed_forward_prepared.1} parent=1 // pred_region
      %s314 = ssub.s32 256, 256
      %315 = vsyncadd [#allocation4], %s314
      %s316 = sshll.u32 [#allocation3], 4
      %s317 = int_to_ptr.vmem [resolvable:$true] %s316
      %322 = dma.vmem_to_hbm [thread:$0]  %s317, 256, %s4, [#allocation4], 128, 128, 8
    $region29: #{feed_forward_prepared.1} parent=1 // pred_fallthru
      _
    // Predicated region
    $region30: #{feed_forward_prepared.1} parent=1 // pred_check
      _
    $region31: #{feed_forward_prepared.1} parent=1 // pred_check_branch
      %324 = sbr.rel (0) target = $region33
    $region32: #{feed_forward_prepared.1} parent=1 // pred_region
      %325 = dma.done [#allocation4], 256
    $region33: #{feed_forward_prepared.1} parent=1 // pred_fallthru
      _
    %326 = vsyncpa [#allocation4], 1

</llo_original>
